<compile_context>
chip_gen: v6e
topology: v6e:2x2x1
jax: 0.10.0
libtpu: 0.0.40
codegen_flags: <defaults>
</compile_context>

<pallas_src>
import functools

import jax
import jax.numpy as jnp
from jax.experimental import pallas as pl
from jax.experimental.pallas import tpu as pltpu

_SUBLANE = 8
_LANE = 128


def _learnable_sigmoid_kernel(x_ref, slope_ref, o_ref, *, beta):
    # x_ref block: (1, TF, TT) -> work on the (TF, TT) slab; TT on the lane axis.
    x = x_ref[0].astype(jnp.float32)          # (TF, TT)
    s = slope_ref[...].astype(jnp.float32)    # (TF, 1), lane-broadcasts along TT
    z = s * x
    # beta * sigmoid(z) == (beta/2) * tanh(z/2) + beta/2
    # -> one EUP tanh + VPU mul/add; no f32 divide (Newton sequence) on the VPU.
    half_beta = 0.5 * beta
    y = half_beta * jnp.tanh(0.5 * z) + half_beta
    o_ref[0] = y.astype(o_ref.dtype)


def _choose_tiles(f, t, itemsize, target_bytes=2 * 1024 * 1024):
    """Pick (tf, tt) so each x tile is lane-dense and ~<=2 MiB.

    tt: full T when modest, else 2048 lanes (multiple of 128 -> legal ragged tile).
    tf: as many rows as fit the byte target, rounded to the 8-sublane granule.
    Double-buffered in + out => ~4 * tile_bytes of VMEM, far below the 32 MiB
    scoped default on every generation (v5e/v6e/v7x).
    """
    tt = t if t <= 2048 else 2048
    rows = max(_SUBLANE, target_bytes // (tt * itemsize))
    rows = (rows // _SUBLANE) * _SUBLANE
    tf = f if f <= rows else rows
    return tf, tt


def learnable_sigmoid_2d(x, slope, beta=1.0):
    """Pallas forward of LearnableSigmoid_2d.

    x:     (B, F, T), F == in_features
    slope: (F, 1) learnable parameter
    returns beta * sigmoid(slope * x), shape (B, F, T), dtype of x.
    """
    b, f, t = x.shape
    assert slope.shape == (f, 1), (slope.shape, f)

    itemsize = jnp.dtype(x.dtype).itemsize
    tf, tt = _choose_tiles(f, t, itemsize)
    grid = (b, pl.cdiv(f, tf), pl.cdiv(t, tt))

    kernel = functools.partial(_learnable_sigmoid_kernel, beta=float(beta))

    n = b * f * t
    cost = pl.CostEstimate(
        flops=4 * n,                 # mul(slope), mul/add around tanh, cast-ish slack
        transcendentals=n,           # one tanh per element
        bytes_accessed=2 * n * itemsize + slope.size * jnp.dtype(slope.dtype).itemsize,
    )

    return pl.pallas_call(
        kernel,
        out_shape=jax.ShapeDtypeStruct((b, f, t), x.dtype),
        grid_spec=pltpu.PrefetchScalarGridSpec(
            num_scalar_prefetch=0,
            grid=grid,
            in_specs=[
                # Streaming input: (1, TF, TT) tiles, TT on the 128-wide lane axis.
                pl.BlockSpec((1, tf, tt), lambda i, j, k: (i, j, k)),
                # slope tile follows only the F-tile axis -> resident across the
                # streaming T axis, never re-DMA'd per T step.
                pl.BlockSpec((tf, 1), lambda i, j, k: (j, 0)),
            ],
            out_specs=pl.BlockSpec((1, tf, tt), lambda i, j, k: (i, j, k)),
        ),
        compiler_params=pltpu.CompilerParams(
            dimension_semantics=("parallel", "parallel", "parallel"),
            vmem_limit_bytes=32 * 1024 * 1024,
        ),
        cost_estimate=cost,
    )(x, slope)


if __name__ == "__main__":
    B, F, T = 2, 64, 256   # batch, in_features (frequency bins), time frames
    BETA = 2.0

    key = jax.random.PRNGKey(0)
    k_x, k_s = jax.random.split(key)
    x = jax.random.normal(k_x, (B, F, T), jnp.float32)
    # Module initializes slope to ones; perturb so the per-row broadcast is real.
    slope = 1.0 + 0.1 * jax.random.normal(k_s, (F, 1), jnp.float32)

    fwd = jax.jit(functools.partial(learnable_sigmoid_2d, beta=BETA))
    out = jax.block_until_ready(fwd(x, slope))

    # Pure-JAX reference: beta * sigmoid(slope * x)
    ref = BETA * jax.nn.sigmoid(slope[None, :, :] * x)

    assert out.shape == (B, F, T), out.shape
    assert bool(jnp.all(jnp.isfinite(out)))
    max_err = float(jnp.max(jnp.abs(out - ref)))
    assert max_err < 1e-5, max_err
    print("KERNEL_OK")
</pallas_src>

<mosaic_0001>
module attributes {stable_mosaic.version = 11 : i64} {
  func.func @_learnable_sigmoid_kernel(%arg0: i32, %arg1: i32, %arg2: i32, %arg3: memref<1x64x256xf32, #tpu.memory_space<vmem>>, %arg4: memref<64x1xf32, #tpu.memory_space<vmem>>, %arg5: memref<1x64x256xf32, #tpu.memory_space<vmem>>) attributes {dimension_semantics = [#tpu.dimension_semantics<parallel>, #tpu.dimension_semantics<parallel>, #tpu.dimension_semantics<parallel>], iteration_bounds = array<i64: 2, 1, 1>, scalar_prefetch = 0 : i64, scratch_operands = 0 : i64, tpu.core_type = #tpu.core_type<tc>, window_params = [{transform_indices = @transform_0, window_bounds = array<i64: 1, 64, 256>}, {transform_indices = @transform_1, window_bounds = array<i64: 64, 1>}, {transform_indices = @transform_2, window_bounds = array<i64: 1, 64, 256>}]} {
    %c0 = arith.constant 0 : index
    %c0_0 = arith.constant 0 : index
    %c0_1 = arith.constant 0 : index
    %0 = vector.load %arg3[%c0, %c0_0, %c0_1] : memref<1x64x256xf32, #tpu.memory_space<vmem>>, vector<1x64x256xf32>
    %1 = vector.shape_cast %0 : vector<1x64x256xf32> to vector<64x256xf32>
    %c0_2 = arith.constant 0 : index
    %c0_3 = arith.constant 0 : index
    %2 = vector.load %arg4[%c0_2, %c0_3] : memref<64x1xf32, #tpu.memory_space<vmem>>, vector<64x1xf32>
    %3 = vector.broadcast %2 : vector<64x1xf32> to vector<64x256xf32>
    %4 = arith.mulf %3, %1 : vector<64x256xf32>
    %cst = arith.constant 5.000000e-01 : f32
    %5 = vector.broadcast %cst : f32 to vector<64x256xf32>
    %6 = arith.mulf %5, %4 : vector<64x256xf32>
    %7 = math.tanh %6 : vector<64x256xf32>
    %cst_4 = arith.constant 1.000000e+00 : f32
    %8 = vector.broadcast %cst_4 : f32 to vector<64x256xf32>
    %9 = arith.mulf %8, %7 : vector<64x256xf32>
    %cst_5 = arith.constant 1.000000e+00 : f32
    %10 = vector.broadcast %cst_5 : f32 to vector<64x256xf32>
    %11 = arith.addf %9, %10 : vector<64x256xf32>
    %c0_6 = arith.constant 0 : index
    %c0_7 = arith.constant 0 : index
    %c0_8 = arith.constant 0 : index
    %12 = vector.load %arg5[%c0_6, %c0_7, %c0_8] : memref<1x64x256xf32, #tpu.memory_space<vmem>>, vector<1x64x256xf32>
    %13 = vector.shape_cast %12 : vector<1x64x256xf32> to vector<64x256xf32>
    %14 = vector.shape_cast %11 : vector<64x256xf32> to vector<1x64x256xf32>
    tpu.vector_store %arg5[%c0_6, %c0_7, %c0_8], %14 {strides = array<i32>} : memref<1x64x256xf32, #tpu.memory_space<vmem>>, vector<1x64x256xf32>,
    return
  }
  func.func @transform_0(%arg0: i32, %arg1: i32, %arg2: i32) -> (i32, i32, i32) {
    %c0_i32 = arith.constant 0 : i32
    return %arg0, %arg1, %arg2 : i32, i32, i32
  }
  func.func @transform_1(%arg0: i32, %arg1: i32, %arg2: i32) -> (i32, i32) {
    %c0_i32 = arith.constant 0 : i32
    %c0_i32_0 = arith.constant 0 : i32
    return %arg1, %c0_i32 : i32, i32
  }
  func.func @transform_2(%arg0: i32, %arg1: i32, %arg2: i32) -> (i32, i32, i32) {
    %c0_i32 = arith.constant 0 : i32
    return %arg0, %arg1, %arg2 : i32, i32, i32
  }
}

</mosaic_0001>

<llo_original>
// kernel: learnable_sigmoid_2d.1
$region0: #{learnable_sigmoid_2d.1}
  #allocation0 [shape = 'u32[]', space=smem, size = 0x4, offset = 0x4, fixed_abs, tag = 'smem constant byte address 0x4 - core index']
  #allocation1 [shape = 'u32[144,128]{1,0:T(1,128)}', space=vmem, size = 0x12000, scoped, tag = 'internal scratch']
  %s0 = inlined_call_operand.hbm [shape: f32[2,64,256], index: 0, kind: input, shape index: {}]
  %s1 = inlined_call_operand.vmem [shape: f32[64,1], index: 1, kind: input, shape index: {}]
  %s2 = inlined_call_operand.hbm [shape: f32[2,64,256], index: 2, kind: output, shape index: {}]
  %s3 = sld [smem:[#allocation0]]
  $region45: #{learnable_sigmoid_2d.1} parent=0
    _
  %s5 = ssub.s32 1, %s3
  %s6 = scalar_select 0, %s5, %s3
  $region1: #{learnable_sigmoid_2d.1} parent=0
    #allocation2 [shape = 'u8[131072]{0}', space=vmem, size = 0x20000, scoped, tag = 'input window, operand 0']
    #allocation3 [shape = 's32[2]{0}', space=sflag, size = 0x8, scoped, tag = 'scoped memory for learnable_sigmoid_2d.1']
    #allocation4 [shape = 's32[2]{0}', space=sflag, size = 0x8, scoped, tag = 'scoped memory for learnable_sigmoid_2d.1']
    #allocation5 [shape = 'u8[131072]{0}', space=vmem, size = 0x20000, scoped, tag = 'output window, operand 0']
    %7 = vsyncpa [#allocation3], 0
    %s8 = scalar_lea.sflag [#allocation3], 1
    %9 = vsyncpa %s8, 0
    %10 = vsyncpa [#allocation4], 0
    %s11 = scalar_lea.sflag [#allocation4], 1
    %12 = vsyncpa %s11, 0
    loop: start=0, step=1, limit=4
    $region2: #{learnable_sigmoid_2d.1} parent=1 // loop_pre_header
      _
    $region3: #{learnable_sigmoid_2d.1} parent=1 // loop_header
      %s14 = sphi 0, %s18
      %p15 = scmp.ge.s32.totalorder %s14, 4
      %s21 = sphi 0, %s40
      %s22 = sphi 0, %s36
      %s23 = sphi 0, %s32
      %s24 = sphi 0, %s21
      %s25 = sphi 0, %s22
      %s26 = sphi 0, %s23
      %s27 = sphi 0, %s24
      %s28 = sphi 0, %s25
      %s29 = sphi 0, %s26
      %s47 = sphi 0, %s49
      %s50 = sphi 0, %s47
      %s51 = sphi 0, %s50
      %s67 = sphi 0, %s51
      %s73 = sphi 0, %s75
      %s76 = sphi 0, %s73
      %s77 = sphi 0, %s76
      %s93 = sphi 0, %s77
      %s103 = sphi 0, %s105
      %s106 = sphi 0, %s103
      %s107 = sphi 0, %s106
      %s123 = sphi 0, %s107
    $region4: #{learnable_sigmoid_2d.1} parent=1 // loop_header_branch
      %17 = sbr.rel (%p15) target = $region8
    $region5: #{learnable_sigmoid_2d.1} parent=1 // loop_body
      %s19 = ssub.s32 %s14, 1
      %s20 = ssub.s32 %s14, 2
      %s30 = sadd.s32 1, %s23
      %p31 = scmp.ge.s32.totalorder %s30, 1
      %s32 = scalar_select %p31, 0, %s30
      %s33 = sadd.s32 1, %s22
      %s34 = scalar_select %p31, %s33, %s22
      %p35 = scmp.ge.s32.totalorder %s34, 1
      %s36 = scalar_select %p35, 0, %s34
      %s37 = sadd.s32 1, %s21
      %s38 = scalar_select %p35, %s37, %s21
      %p39 = scmp.ge.s32.totalorder %s38, 2
      %s40 = scalar_select %p39, 0, %s38
      %s41 = ssub.s32 %s21, %s40
      %s42 = ssub.s32 %s22, %s36
      %s43 = sor.u32 %s41, %s42
      %s44 = ssub.s32 %s23, %s32
      %s45 = sor.u32 %s43, %s44
      %p46 = scmp.eq.s32.totalorder %s45, 0
      %s48 = sadd.s32 %s47, 1
      %s49 = scalar_select %p46, %s47, %s48
      %p52 = pneg %p46
      %p53 = scmp.eq.s32.totalorder %s14, 1
      %p54 = por %p52, %p53
      %p55 = scmp.ne.s32.totalorder %s47, %s50
      %p56 = scmp.eq.s32.totalorder %s14, 0
      %p57 = por %p55, %p56
      %p58 = scmp.ne.s32.totalorder %s47, %s50
      %p59 = scmp.eq.s32.totalorder %s19, 1
      %p60 = por %p58, %p59
      %p61 = scmp.ne.s32.totalorder %s50, %s51
      %p62 = scmp.eq.s32.totalorder %s19, 0
      %p63 = por %p61, %p62
      %p64 = scmp.ne.s32.totalorder %s50, %s51
      %p65 = scmp.eq.s32.totalorder %s20, 1
      %p66 = por %p64, %p65
      %p68 = scmp.ne.s32.totalorder %s51, %s67
      %p69 = scmp.eq.s32.totalorder %s20, 0
      %p70 = por %p68, %p69
      %s71 = ssub.s32 %s22, %s36
      %p72 = scmp.eq.s32.totalorder %s71, 0
      %s74 = sadd.s32 %s73, 1
      %s75 = scalar_select %p72, %s73, %s74
      %p78 = pneg %p72
      %p79 = scmp.eq.s32.totalorder %s14, 1
      %p80 = por %p78, %p79
      %p81 = scmp.ne.s32.totalorder %s73, %s76
      %p82 = scmp.eq.s32.totalorder %s14, 0
      %p83 = por %p81, %p82
      %p84 = scmp.ne.s32.totalorder %s73, %s76
      %p85 = scmp.eq.s32.totalorder %s19, 1
      %p86 = por %p84, %p85
      %p87 = scmp.ne.s32.totalorder %s76, %s77
      %p88 = scmp.eq.s32.totalorder %s19, 0
      %p89 = por %p87, %p88
      %p90 = scmp.ne.s32.totalorder %s76, %s77
      %p91 = scmp.eq.s32.totalorder %s20, 1
      %p92 = por %p90, %p91
      %p94 = scmp.ne.s32.totalorder %s77, %s93
      %p95 = scmp.eq.s32.totalorder %s20, 0
      %p96 = por %p94, %p95
      %s97 = ssub.s32 %s21, %s40
      %s98 = ssub.s32 %s22, %s36
      %s99 = sor.u32 %s97, %s98
      %s100 = ssub.s32 %s23, %s32
      %s101 = sor.u32 %s99, %s100
      %p102 = scmp.eq.s32.totalorder %s101, 0
      %s104 = sadd.s32 %s103, 1
      %s105 = scalar_select %p102, %s103, %s104
      %p108 = pneg %p102
      %p109 = scmp.eq.s32.totalorder %s14, 1
      %p110 = por %p108, %p109
      %p111 = scmp.ne.s32.totalorder %s103, %s106
      %p112 = scmp.eq.s32.totalorder %s14, 0
      %p113 = por %p111, %p112
      %p114 = scmp.ne.s32.totalorder %s103, %s106
      %p115 = scmp.eq.s32.totalorder %s19, 1
      %p116 = por %p114, %p115
      %p117 = scmp.ne.s32.totalorder %s106, %s107
      %p118 = scmp.eq.s32.totalorder %s19, 0
      %p119 = por %p117, %p118
      %p120 = scmp.ne.s32.totalorder %s106, %s107
      %p121 = scmp.eq.s32.totalorder %s20, 1
      %p122 = por %p120, %p121
      %p124 = scmp.ne.s32.totalorder %s107, %s123
      %p125 = scmp.eq.s32.totalorder %s20, 0
      %p126 = por %p124, %p125
      %p127 = scmp.le.s32.totalorder 1, %s14
      %p128 = scmp.lt.s32.totalorder %s14, 3
      %p129 = pnand %p127, %p128
      %p130 = pneg %p129
      // Predicated region
      $region9: #{learnable_sigmoid_2d.1} parent=5 // pred_check
        _
      $region10: #{learnable_sigmoid_2d.1} parent=5 // pred_check_branch
        %132 = sbr.rel (%p129) target = $region12
      $region11: #{learnable_sigmoid_2d.1} parent=5 // pred_region
        %s133 = ssub.s32 %s14, 1
        // Predicated region
        $region13: #{learnable_sigmoid_2d.1} parent=11 // pred_check
          %p134 = pneg %p89
        $region14: #{learnable_sigmoid_2d.1} parent=11 // pred_check_branch
          %136 = sbr.rel (%p134) target = $region16
        $region15: #{learnable_sigmoid_2d.1} parent=11 // pred_region
          %s137 = smul.u32 8, %s25
          %p138 = scmp.lt.s32.totalorder %s137, 7
          %s139 = scalar_select %p138, %s137, 7
          %s140 = smul.addr %s139, 8
          %s141 = scalar_lea.vmem %s1, %s140
          %s142 = smul.u32 8, %s25
        $region16: #{learnable_sigmoid_2d.1} parent=11 // pred_fallthru
          _
      $region12: #{learnable_sigmoid_2d.1} parent=5 // pred_fallthru
        _
      %p143 = scmp.lt.s32.totalorder %s14, 2
      // Predicated region
      $region17: #{learnable_sigmoid_2d.1} parent=5 // pred_check
        %p144 = pneg %p143
      $region18: #{learnable_sigmoid_2d.1} parent=5 // pred_check_branch
        %146 = sbr.rel (%p144) target = $region20
      $region19: #{learnable_sigmoid_2d.1} parent=5 // pred_region
        // Predicated region
        $region21: #{learnable_sigmoid_2d.1} parent=19 // pred_check
          %p147 = pneg %p57
        $region22: #{learnable_sigmoid_2d.1} parent=19 // pred_check_branch
          %149 = sbr.rel (%p147) target = $region24
        $region23: #{learnable_sigmoid_2d.1} parent=19 // pred_region
          %s150 = sand.u32 %s47, 1
          %s151 = scalar_lea.sflag [#allocation3], %s150
          %s152 = sand.u32 %s47, 1
          %s153 = smul.addr %s152, 128
          %s154 = scalar_lea.vmem [#allocation2], %s153
          %s155 = smul.u32 8, %s22
          %s156 = smul.u32 2, %s23
          %s158 = ssub.s32 2048, 2048
          %159 = vsyncadd %s151, %s158
          %s160 = smul.addr %s155, 2
          %s161 = sadd.s32 %s156, %s160
          %s162 = smul.addr %s21, 16
          %s163 = sadd.s32 %s161, %s162
          %s164 = smul.addr %s163, 128
          %s165 = scalar_lea.hbm %s0, %s164
          %s166 = sshll.u32 %s154, 4
          %s167 = int_to_ptr.vmem [resolvable:$true] %s166
          %172 = dma.hbm_to_vmem [thread:$0]  %s165, 2048, %s167, %s151, 256, 256, 16
        $region24: #{learnable_sigmoid_2d.1} parent=19 // pred_fallthru
          _
      $region20: #{learnable_sigmoid_2d.1} parent=5 // pred_fallthru
        _
      %p173 = scmp.le.s32.totalorder 1, %s14
      %p174 = scmp.lt.s32.totalorder %s14, 3
      %p175 = pnand %p173, %p174
      %p176 = pneg %p175
      // Predicated region
      $region25: #{learnable_sigmoid_2d.1} parent=5 // pred_check
        _
      $region26: #{learnable_sigmoid_2d.1} parent=5 // pred_check_branch
        %178 = sbr.rel (%p175) target = $region28
      $region27: #{learnable_sigmoid_2d.1} parent=5 // pred_region
        %s179 = ssub.s32 %s14, 1
        %s180 = sand.u32 %s50, 1
        %s181 = scalar_lea.sflag [#allocation3], %s180
        %s182 = sand.u32 %s50, 1
        %s183 = smul.addr %s182, 128
        %s184 = scalar_lea.vmem [#allocation2], %s183
        // Predicated region
        $region29: #{learnable_sigmoid_2d.1} parent=27 // pred_check
          %p185 = pneg %p63
        $region30: #{learnable_sigmoid_2d.1} parent=27 // pred_check_branch
          %187 = sbr.rel (%p185) target = $region32
        $region31: #{learnable_sigmoid_2d.1} parent=27 // pred_region
          %188 = dma.done %s181, 2048
        $region32: #{learnable_sigmoid_2d.1} parent=27 // pred_fallthru
          _
        %s189 = sand.u32 %s50, 1
        %s190 = scalar_lea.sflag [#allocation3], %s189
        %s191 = sand.u32 %s50, 1
        %s192 = smul.addr %s191, 128
        %s193 = scalar_lea.vmem [#allocation2], %s192
        %p194 = pneg %p63
        %p195 = pneg %p60
        %s196 = smul.u32 8, %s25
        %p197 = scmp.lt.s32.totalorder %s196, 7
        %s198 = scalar_select %p197, %s196, 7
        %s199 = smul.addr %s198, 8
        %s200 = scalar_lea.vmem %s1, %s199
        %p201 = pneg %p89
        %p202 = pneg %p86
        %p203 = pneg %p119
        %p204 = pneg %p116
        %s205 = sand.u32 %s106, 1
        %s206 = scalar_lea.sflag [#allocation4], %s205
        %s207 = sand.u32 %s106, 1
        %s208 = smul.addr %s207, 128
        %s209 = scalar_lea.vmem [#allocation5], %s208
        %s210 = smul.u32 8, %s25
        %s211 = smul.u32 2, %s26
        %s212 = smul.u32 8, %s25
        %p213 = scmp.lt.s32.totalorder %s212, 7
        %s214 = scalar_select %p213, %s212, 7
        %s215 = smul.addr %s214, 8
        %s216 = scalar_lea.vmem %s1, %s215
        %s217 = smul.u32 8, %s25
        %s218 = smul.u32 8, %s25
        %s219 = smul.u32 2, %s26
        %v220 = vld [vmem:[%s184] sm:$0xff]
        %v221 = vld [vmem:[%s184 + $0x8] sm:$0xff]
        %v222 = vld [vmem:[%s184 + $0x10] sm:$0xff]
        %v223 = vld [vmem:[%s184 + $0x18] sm:$0xff]
        %v224 = vld [vmem:[%s184 + $0x20] sm:$0xff]
        %v225 = vld [vmem:[%s184 + $0x28] sm:$0xff]
        %v226 = vld [vmem:[%s184 + $0x30] sm:$0xff]
        %v227 = vld [vmem:[%s184 + $0x38] sm:$0xff]
        %v228 = vld [vmem:[%s184 + $0x40] sm:$0xff]
        %v229 = vld [vmem:[%s184 + $0x48] sm:$0xff]
        %v230 = vld [vmem:[%s184 + $0x50] sm:$0xff]
        %v231 = vld [vmem:[%s184 + $0x58] sm:$0xff]
        %v232 = vld [vmem:[%s184 + $0x60] sm:$0xff]
        %v233 = vld [vmem:[%s184 + $0x68] sm:$0xff]
        %v234 = vld [vmem:[%s184 + $0x70] sm:$0xff]
        %v235 = vld [vmem:[%s184 + $0x78] sm:$0xff]
        %v236 = vld [vmem:[%s216] sm:$0xff]
        %v237 = vld [vmem:[%s216 + $0x8] sm:$0xff]
        %v238 = vld [vmem:[%s216 + $0x10] sm:$0xff]
        %v239 = vld [vmem:[%s216 + $0x18] sm:$0xff]
        %v240 = vld [vmem:[%s216 + $0x20] sm:$0xff]
        %v241 = vld [vmem:[%s216 + $0x28] sm:$0xff]
        %v242 = vld [vmem:[%s216 + $0x30] sm:$0xff]
        %v243 = vld [vmem:[%s216 + $0x38] sm:$0xff]
        %245 = vset.pattern.permute.xlu0 0
        %246 = vperm.xlu0 %245, %v236
        %v247 = vpop.permute.xlu0 %246
        %250 = vset.pattern.permute.xlu0 0
        %251 = vperm.xlu0 %250, %v237
        %v252 = vpop.permute.xlu0 %251
        %255 = vset.pattern.permute.xlu0 0
        %256 = vperm.xlu0 %255, %v238
        %v257 = vpop.permute.xlu0 %256
        %260 = vset.pattern.permute.xlu0 0
        %261 = vperm.xlu0 %260, %v239
        %v262 = vpop.permute.xlu0 %261
        %265 = vset.pattern.permute.xlu0 0
        %266 = vperm.xlu0 %265, %v240
        %v267 = vpop.permute.xlu0 %266
        %270 = vset.pattern.permute.xlu0 0
        %271 = vperm.xlu0 %270, %v241
        %v272 = vpop.permute.xlu0 %271
        %275 = vset.pattern.permute.xlu0 0
        %276 = vperm.xlu0 %275, %v242
        %v277 = vpop.permute.xlu0 %276
        %280 = vset.pattern.permute.xlu0 0
        %281 = vperm.xlu0 %280, %v243
        %v282 = vpop.permute.xlu0 %281
        %v284 = vmul.f32 %v247, %v220
        %v285 = vmul.f32 %v247, %v221
        %v286 = vmul.f32 %v252, %v222
        %v287 = vmul.f32 %v252, %v223
        %v288 = vmul.f32 %v257, %v224
        %v289 = vmul.f32 %v257, %v225
        %v290 = vmul.f32 %v262, %v226
        %v291 = vmul.f32 %v262, %v227
        %v292 = vmul.f32 %v267, %v228
        %v293 = vmul.f32 %v267, %v229
        %v294 = vmul.f32 %v272, %v230
        %v295 = vmul.f32 %v272, %v231
        %v296 = vmul.f32 %v277, %v232
        %v297 = vmul.f32 %v277, %v233
        %v298 = vmul.f32 %v282, %v234
        %v299 = vmul.f32 %v282, %v235
        %v300 = vmul.f32 %v284, 0.5
        %v301 = vmul.f32 %v285, 0.5
        %v302 = vmul.f32 %v286, 0.5
        %v303 = vmul.f32 %v287, 0.5
        %v304 = vmul.f32 %v288, 0.5
        %v305 = vmul.f32 %v289, 0.5
        %v306 = vmul.f32 %v290, 0.5
        %v307 = vmul.f32 %v291, 0.5
        %v308 = vmul.f32 %v292, 0.5
        %v309 = vmul.f32 %v293, 0.5
        %v310 = vmul.f32 %v294, 0.5
        %v311 = vmul.f32 %v295, 0.5
        %v312 = vmul.f32 %v296, 0.5
        %v313 = vmul.f32 %v297, 0.5
        %v314 = vmul.f32 %v298, 0.5
        %v315 = vmul.f32 %v299, 0.5
        %v316 = vtanh.pop %v300
        %v317 = vtanh.pop %v301
        %v318 = vtanh.pop %v302
        %v319 = vtanh.pop %v303
        %v320 = vtanh.pop %v304
        %v321 = vtanh.pop %v305
        %v322 = vtanh.pop %v306
        %v323 = vtanh.pop %v307
        %v324 = vtanh.pop %v308
        %v325 = vtanh.pop %v309
        %v326 = vtanh.pop %v310
        %v327 = vtanh.pop %v311
        %v328 = vtanh.pop %v312
        %v329 = vtanh.pop %v313
        %v330 = vtanh.pop %v314
        %v331 = vtanh.pop %v315
        %v332 = vadd.f32 %v316, 1.0
        %v333 = vadd.f32 %v317, 1.0
        %v334 = vadd.f32 %v318, 1.0
        %v335 = vadd.f32 %v319, 1.0
        %v336 = vadd.f32 %v320, 1.0
        %v337 = vadd.f32 %v321, 1.0
        %v338 = vadd.f32 %v322, 1.0
        %v339 = vadd.f32 %v323, 1.0
        %v340 = vadd.f32 %v324, 1.0
        %v341 = vadd.f32 %v325, 1.0
        %v342 = vadd.f32 %v326, 1.0
        %v343 = vadd.f32 %v327, 1.0
        %v344 = vadd.f32 %v328, 1.0
        %v345 = vadd.f32 %v329, 1.0
        %v346 = vadd.f32 %v330, 1.0
        %v347 = vadd.f32 %v331, 1.0
        %348 = vst [vmem:[%s209] sm:$0xff] %v332
        %349 = vst [vmem:[%s209 + $0x8] sm:$0xff] %v333
        %350 = vst [vmem:[%s209 + $0x10] sm:$0xff] %v334
        %351 = vst [vmem:[%s209 + $0x18] sm:$0xff] %v335
        %352 = vst [vmem:[%s209 + $0x20] sm:$0xff] %v336
        %353 = vst [vmem:[%s209 + $0x28] sm:$0xff] %v337
        %354 = vst [vmem:[%s209 + $0x30] sm:$0xff] %v338
        %355 = vst [vmem:[%s209 + $0x38] sm:$0xff] %v339
        %356 = vst [vmem:[%s209 + $0x40] sm:$0xff] %v340
        %357 = vst [vmem:[%s209 + $0x48] sm:$0xff] %v341
        %358 = vst [vmem:[%s209 + $0x50] sm:$0xff] %v342
        %359 = vst [vmem:[%s209 + $0x58] sm:$0xff] %v343
        %360 = vst [vmem:[%s209 + $0x60] sm:$0xff] %v344
        %361 = vst [vmem:[%s209 + $0x68] sm:$0xff] %v345
        %362 = vst [vmem:[%s209 + $0x70] sm:$0xff] %v346
        %363 = vst [vmem:[%s209 + $0x78] sm:$0xff] %v347
        %s364 = sand.u32 %s106, 1
        %s365 = scalar_lea.sflag [#allocation4], %s364
        %s366 = sand.u32 %s106, 1
        %s367 = smul.addr %s366, 128
        %s368 = scalar_lea.vmem [#allocation5], %s367
        // Predicated region
        $region33: #{learnable_sigmoid_2d.1} parent=27 // pred_check
          %p369 = pneg %p116
        $region34: #{learnable_sigmoid_2d.1} parent=27 // pred_check_branch
          %371 = sbr.rel (%p369) target = $region36
        $region35: #{learnable_sigmoid_2d.1} parent=27 // pred_region
          %s372 = smul.u32 8, %s25
          %s373 = smul.u32 2, %s26
          %s375 = ssub.s32 2048, 2048
          %376 = vsyncadd %s365, %s375
          %s377 = smul.addr %s372, 2
          %s378 = sadd.s32 %s373, %s377
          %s379 = smul.addr %s24, 16
          %s380 = sadd.s32 %s378, %s379
          %s381 = smul.addr %s380, 128
          %s382 = scalar_lea.hbm %s2, %s381
          %s383 = sshll.u32 %s368, 4
          %s384 = int_to_ptr.vmem [resolvable:$true] %s383
          %389 = dma.vmem_to_hbm [thread:$0]  %s384, 2048, %s382, %s365, 256, 256, 16
        $region36: #{learnable_sigmoid_2d.1} parent=27 // pred_fallthru
          _
      $region28: #{learnable_sigmoid_2d.1} parent=5 // pred_fallthru
        _
      %p390 = scmp.le.s32.totalorder 2, %s14
      // Predicated region
      $region37: #{learnable_sigmoid_2d.1} parent=5 // pred_check
        %p391 = pneg %p390
      $region38: #{learnable_sigmoid_2d.1} parent=5 // pred_check_branch
        %393 = sbr.rel (%p391) target = $region40
      $region39: #{learnable_sigmoid_2d.1} parent=5 // pred_region
        %s394 = ssub.s32 %s14, 2
        // Predicated region
        $region41: #{learnable_sigmoid_2d.1} parent=39 // pred_check
          %p395 = pneg %p122
        $region42: #{learnable_sigmoid_2d.1} parent=39 // pred_check_branch
          %397 = sbr.rel (%p395) target = $region44
        $region43: #{learnable_sigmoid_2d.1} parent=39 // pred_region
          %s398 = sand.u32 %s107, 1
          %s399 = scalar_lea.sflag [#allocation4], %s398
          %s400 = sand.u32 %s107, 1
          %s401 = smul.addr %s400, 128
          %s402 = scalar_lea.vmem [#allocation5], %s401
          %403 = dma.done %s399, 2048
        $region44: #{learnable_sigmoid_2d.1} parent=39 // pred_fallthru
          _
      $region40: #{learnable_sigmoid_2d.1} parent=5 // pred_fallthru
        _
    $region6: #{learnable_sigmoid_2d.1} parent=1 // loop_footer
      %s18 = sadd.s32 1, %s14
    $region7: #{learnable_sigmoid_2d.1} parent=1 // loop_footer_branch
      %13 = sbr.rel target = $region3
    $region8: #{learnable_sigmoid_2d.1} parent=1 // loop_exit
      _
    %404 = vsyncpa [#allocation3], 1
    %s405 = scalar_lea.sflag [#allocation3], 1
    %406 = vsyncpa %s405, 1
    %407 = vsyncpa [#allocation4], 1
    %s408 = scalar_lea.sflag [#allocation4], 1
    %409 = vsyncpa %s408, 1

</llo_original>
